<compile_context>
chip_gen: v7x
topology: tpu7x:2x2x1
jax: 0.10.0
libtpu: 0.0.40
codegen_flags: <defaults>
</compile_context>

<pallas_src>
import functools
import inspect

import jax
import jax.numpy as jnp
from jax.experimental import pallas as pl
from jax.experimental.pallas import tpu as pltpu

HIDDEN = 256
LANE = 128

# pipeline_mode= is a newer BlockSpec kwarg; guard so the script runs on any
# recent jax even if absent (the optimization is a small VMEM saving only).
_BLOCKSPEC_HAS_PIPELINE_MODE = (
    "pipeline_mode" in inspect.signature(pl.BlockSpec).parameters
)


def _round_up(x: int, m: int) -> int:
    return ((x + m - 1) // m) * m


def _td3_actor_kernel(x_ref, w1_ref, b1_ref, w2_ref, b2_ref, w3_ref, b3_ref,
                      out_ref, *, max_action: float):
    """One (tile_b, state_dim) batch tile through the full 3-layer MLP."""
    wdt = w1_ref.dtype  # matmul input dtype (f32 or bf16); accumulation is f32

    x = x_ref[...].astype(wdt)                                      # (tb, S)

    # layer 1: Linear(S, 256) + ReLU   (MXU matmul, f32 accumulate)
    h = jnp.dot(x, w1_ref[...], preferred_element_type=jnp.float32) + b1_ref[...]
    h = jnp.maximum(h, 0.0)

    # layer 2: Linear(256, 256) + ReLU
    h = jnp.dot(h.astype(wdt), w2_ref[...],
                preferred_element_type=jnp.float32) + b2_ref[...]
    h = jnp.maximum(h, 0.0)

    # layer 3: Linear(256, padded_action_dim), then max_action * tanh (EUP)
    h = jnp.dot(h.astype(wdt), w3_ref[...],
                preferred_element_type=jnp.float32) + b3_ref[...]
    out_ref[...] = (max_action * jnp.tanh(h)).astype(out_ref.dtype)


def prepare_td3_actor_params(params, weight_dtype=jnp.bfloat16):
    """One-time (hoisted out of the forward) param preparation.

    - Casts weights to `weight_dtype` (bf16 by default); biases stay f32 since
      all elementwise math / accumulation is f32.
    - Zero-pads w3/b3 columns to a multiple of 128 so the kernel's output
      store is lane-dense (padded columns produce exactly tanh(0)=0).
    """
    action_dim = params["w3"].shape[1]
    padded_adim = max(LANE, _round_up(action_dim, LANE))

    w3, b3 = params["w3"], params["b3"]
    if padded_adim != action_dim:
        w3 = jnp.pad(w3, ((0, 0), (0, padded_adim - action_dim)))
        b3 = jnp.pad(b3, ((0, 0), (0, padded_adim - action_dim)))

    w1, w2 = params["w1"], params["w2"]
    if weight_dtype is not None:
        w1 = w1.astype(weight_dtype)
        w2 = w2.astype(weight_dtype)
        w3 = w3.astype(weight_dtype)

    return {
        "w1": w1, "b1": params["b1"].astype(jnp.float32),
        "w2": w2, "b2": params["b2"].astype(jnp.float32),
        "w3": w3, "b3": b3.astype(jnp.float32),
        "action_dim": action_dim,
    }


def td3_actor_forward(state, params, max_action: float, *,
                      tile_b: int = 1024,
                      single_block_max_batch: int = 2048,
                      out_dtype=jnp.float32,
                      trim_output: bool = True):
    """state: (B, state_dim) f32.  params: raw or prepare_td3_actor_params()."""
    if "action_dim" not in params:
        # Backwards-compatible: prepare on the fly (prefer preparing once).
        params = prepare_td3_actor_params(params)

    B, state_dim = state.shape
    hidden = params["w1"].shape[1]
    action_dim = params["action_dim"]
    padded_adim = params["w3"].shape[1]

    w1, b1 = params["w1"], params["b1"]
    w2, b2 = params["w2"], params["b2"]
    w3, b3 = params["w3"], params["b3"]

    kernel = functools.partial(_td3_actor_kernel, max_action=float(max_action))

    flops = 2 * B * (state_dim * hidden + hidden * hidden + hidden * padded_adim)
    bytes_accessed = (
        state.size * state.dtype.itemsize
        + sum(a.size * a.dtype.itemsize for a in (w1, b1, w2, b2, w3, b3))
        + B * padded_adim * jnp.dtype(out_dtype).itemsize
    )
    cost = pl.CostEstimate(flops=flops,
                           transcendentals=B * action_dim,
                           bytes_accessed=bytes_accessed)

    if B <= single_block_max_batch:
        # Single fused VMEM block: no per-grid-step pipeline overhead at all.
        out = pl.pallas_call(
            kernel,
            out_shape=jax.ShapeDtypeStruct((B, padded_adim), out_dtype),
            in_specs=[pl.BlockSpec(memory_space=pltpu.VMEM)] * 7,
            out_specs=pl.BlockSpec(memory_space=pltpu.VMEM),
            cost_estimate=cost,
        )(state, w1, b1, w2, b2, w3, b3)
    else:
        # Training-scale batch: tile the batch axis; keep weights VMEM-resident.
        tb = min(tile_b, B)
        if B <= 2 * tb:
            # Favor an even, 2-step grid so v7x's two TensorCores each take one
            # batch tile (the axis is marked "parallel"); no-op on v5e/v6e.
            tb = _round_up(pl.cdiv(B, 2), 128)
        grid = (pl.cdiv(B, tb),)
        # NOTE: if B % tb != 0 the last state tile reads past the end of the
        # array; those rows compute garbage, but the masked output store
        # discards them and rows are independent, so results are unaffected.

        def resident(shape):
            # Constant block index -> DMA'd once, never re-fetched across steps.
            kwargs = {}
            if _BLOCKSPEC_HAS_PIPELINE_MODE:
                # A single buffer suffices for never-re-fetched operands.
                kwargs["pipeline_mode"] = pl.Buffered(1)
            return pl.BlockSpec(shape, lambda i: (0, 0), **kwargs)

        out = pl.pallas_call(
            kernel,
            out_shape=jax.ShapeDtypeStruct((B, padded_adim), out_dtype),
            grid=grid,
            in_specs=[
                pl.BlockSpec((tb, state_dim), lambda i: (i, 0)),   # state tile
                resident(w1.shape), resident(b1.shape),
                resident(w2.shape), resident(b2.shape),
                resident(w3.shape), resident(b3.shape),
            ],
            out_specs=pl.BlockSpec((tb, padded_adim), lambda i: (i, 0)),
            compiler_params=pltpu.CompilerParams(
                dimension_semantics=("parallel",)),  # v7x: shard batch over 2 TCs
            cost_estimate=cost,
        )(state, w1, b1, w2, b2, w3, b3)

    if trim_output and padded_adim != action_dim:
        # Consumers that can work on the lane-padded slab should pass
        # trim_output=False to skip this extra read/write pass.
        out = out[:, :action_dim]
    return out


def init_td3_actor_params(key, state_dim: int, action_dim: int, hidden: int = HIDDEN):
    """PyTorch-Linear-style init: U(-1/sqrt(fan_in), 1/sqrt(fan_in)).

    Weights stored as (in_features, out_features) (transpose of torch layout),
    biases as (1, out_features) for clean 2-D broadcasting on TPU.
    """
    keys = jax.random.split(key, 6)

    def linear(kw, kb, fan_in, fan_out):
        bound = 1.0 / jnp.sqrt(jnp.float32(fan_in))
        w = jax.random.uniform(kw, (fan_in, fan_out), jnp.float32, -bound, bound)
        b = jax.random.uniform(kb, (1, fan_out), jnp.float32, -bound, bound)
        return w, b

    w1, b1 = linear(keys[0], keys[1], state_dim, hidden)
    w2, b2 = linear(keys[2], keys[3], hidden, hidden)
    w3, b3 = linear(keys[4], keys[5], hidden, action_dim)
    return {"w1": w1, "b1": b1, "w2": w2, "b2": b2, "w3": w3, "b3": b3}


def td3_actor_reference(state, params, max_action: float):
    """Pure-JAX f32 reference for correctness checking."""
    h1 = jnp.maximum(state @ params["w1"] + params["b1"], 0.0)
    h2 = jnp.maximum(h1 @ params["w2"] + params["b2"], 0.0)
    return max_action * jnp.tanh(h2 @ params["w3"] + params["b3"])


if __name__ == "__main__":
    MAX_ACTION = 2.0
    STATE_DIM, ACTION_DIM = 16, 8

    root = jax.random.PRNGKey(0)
    k_small, k_big, k_params = jax.random.split(root, 3)
    params = init_td3_actor_params(k_params, STATE_DIM, ACTION_DIM)

    # Param preparation hoisted out of the per-call forward (cast + lane pad).
    prepared_bf16 = prepare_td3_actor_params(params, weight_dtype=jnp.bfloat16)
    prepared_f32 = prepare_td3_actor_params(params, weight_dtype=None)

    state_small = jax.random.normal(k_small, (2, STATE_DIM), jnp.float32)
    ref_small = td3_actor_reference(state_small, params, MAX_ACTION)

    # --- tiny batch, f32 weights: single fused VMEM block, tight tolerance ---
    out_f32 = jax.block_until_ready(
        td3_actor_forward(state_small, prepared_f32, MAX_ACTION))
    assert out_f32.shape == (2, ACTION_DIM)
    assert jnp.allclose(out_f32, ref_small, atol=1e-5, rtol=1e-5)

    # --- tiny batch, bf16 weights (default inference path) ---
    out_small = jax.block_until_ready(
        td3_actor_forward(state_small, prepared_bf16, MAX_ACTION))
    assert out_small.shape == (2, ACTION_DIM)
    assert jnp.allclose(out_small, ref_small, atol=5e-2, rtol=5e-2)
    assert bool(jnp.all(jnp.abs(out_small) <= MAX_ACTION + 1e-3))

    # --- grid path (threshold lowered only to exercise it at a small shape):
    #     bf16 resident weights, even 2-step batch grid, bf16 lane-dense out ---
    state_big = jax.random.normal(k_big, (256, STATE_DIM), jnp.float32)
    out_big = jax.block_until_ready(
        td3_actor_forward(state_big, prepared_bf16, MAX_ACTION,
                          tile_b=128, single_block_max_batch=64,
                          out_dtype=jnp.bfloat16))
    ref_big = td3_actor_reference(state_big, params, MAX_ACTION)
    assert out_big.shape == (256, ACTION_DIM)
    out_big_f32 = out_big.astype(jnp.float32)
    assert jnp.allclose(out_big_f32, ref_big, atol=5e-2, rtol=5e-2)
    assert bool(jnp.all(jnp.abs(out_big_f32) <= MAX_ACTION + 2e-2))

    print("KERNEL_OK")
</pallas_src>

<mosaic_0001>
module attributes {stable_mosaic.version = 11 : i64} {
  func.func @_td3_actor_kernel(%arg0: memref<2x16xf32, #tpu.memory_space<vmem>>, %arg1: memref<16x256xf32, #tpu.memory_space<vmem>>, %arg2: memref<1x256xf32, #tpu.memory_space<vmem>>, %arg3: memref<256x256xf32, #tpu.memory_space<vmem>>, %arg4: memref<1x256xf32, #tpu.memory_space<vmem>>, %arg5: memref<256x128xf32, #tpu.memory_space<vmem>>, %arg6: memref<1x128xf32, #tpu.memory_space<vmem>>, %arg7: memref<2x128xf32, #tpu.memory_space<vmem>>) attributes {dimension_semantics = [], scalar_prefetch = 0 : i64, scratch_operands = 0 : i64, tpu.core_type = #tpu.core_type<tc>} {
    %c0 = arith.constant 0 : index
    %c0_0 = arith.constant 0 : index
    %0 = vector.load %arg0[%c0, %c0_0] : memref<2x16xf32, #tpu.memory_space<vmem>>, vector<2x16xf32>
    %c0_1 = arith.constant 0 : index
    %c0_2 = arith.constant 0 : index
    %1 = vector.load %arg1[%c0_1, %c0_2] : memref<16x256xf32, #tpu.memory_space<vmem>>, vector<16x256xf32>
    %cst = arith.constant dense<0.000000e+00> : vector<2x256xf32>
    %2 = tpu.matmul %0, %1, %cst {dimension_numbers = #tpu.dot_dimension_numbers<[1], [0], [0], [1], [0, 0, 1, 1], [], []>} : vector<2x16xf32>, vector<16x256xf32>, vector<2x256xf32> -> vector<2x256xf32>
    %c0_3 = arith.constant 0 : index
    %c0_4 = arith.constant 0 : index
    %3 = vector.load %arg2[%c0_3, %c0_4] : memref<1x256xf32, #tpu.memory_space<vmem>>, vector<1x256xf32>
    %4 = vector.broadcast %3 : vector<1x256xf32> to vector<2x256xf32>
    %5 = arith.addf %2, %4 : vector<2x256xf32>
    %cst_5 = arith.constant 0.000000e+00 : f32
    %6 = vector.broadcast %cst_5 : f32 to vector<2x256xf32>
    %7 = arith.maximumf %5, %6 : vector<2x256xf32>
    %c0_6 = arith.constant 0 : index
    %c0_7 = arith.constant 0 : index
    %8 = vector.load %arg3[%c0_6, %c0_7] : memref<256x256xf32, #tpu.memory_space<vmem>>, vector<256x256xf32>
    %cst_8 = arith.constant dense<0.000000e+00> : vector<2x256xf32>
    %9 = tpu.matmul %7, %8, %cst_8 {dimension_numbers = #tpu.dot_dimension_numbers<[1], [0], [0], [1], [0, 0, 1, 1], [], []>} : vector<2x256xf32>, vector<256x256xf32>, vector<2x256xf32> -> vector<2x256xf32>
    %c0_9 = arith.constant 0 : index
    %c0_10 = arith.constant 0 : index
    %10 = vector.load %arg4[%c0_9, %c0_10] : memref<1x256xf32, #tpu.memory_space<vmem>>, vector<1x256xf32>
    %11 = vector.broadcast %10 : vector<1x256xf32> to vector<2x256xf32>
    %12 = arith.addf %9, %11 : vector<2x256xf32>
    %cst_11 = arith.constant 0.000000e+00 : f32
    %13 = vector.broadcast %cst_11 : f32 to vector<2x256xf32>
    %14 = arith.maximumf %12, %13 : vector<2x256xf32>
    %c0_12 = arith.constant 0 : index
    %c0_13 = arith.constant 0 : index
    %15 = vector.load %arg5[%c0_12, %c0_13] : memref<256x128xf32, #tpu.memory_space<vmem>>, vector<256x128xf32>
    %cst_14 = arith.constant dense<0.000000e+00> : vector<2x128xf32>
    %16 = tpu.matmul %14, %15, %cst_14 {dimension_numbers = #tpu.dot_dimension_numbers<[1], [0], [0], [1], [0, 0, 1, 1], [], []>} : vector<2x256xf32>, vector<256x128xf32>, vector<2x128xf32> -> vector<2x128xf32>
    %c0_15 = arith.constant 0 : index
    %c0_16 = arith.constant 0 : index
    %17 = vector.load %arg6[%c0_15, %c0_16] : memref<1x128xf32, #tpu.memory_space<vmem>>, vector<1x128xf32>
    %18 = vector.broadcast %17 : vector<1x128xf32> to vector<2x128xf32>
    %19 = arith.addf %16, %18 : vector<2x128xf32>
    %20 = math.tanh %19 : vector<2x128xf32>
    %cst_17 = arith.constant 2.000000e+00 : f32
    %21 = vector.broadcast %cst_17 : f32 to vector<2x128xf32>
    %22 = arith.mulf %21, %20 : vector<2x128xf32>
    %c0_18 = arith.constant 0 : index
    %c0_19 = arith.constant 0 : index
    %23 = vector.load %arg7[%c0_18, %c0_19] : memref<2x128xf32, #tpu.memory_space<vmem>>, vector<2x128xf32>
    tpu.vector_store %arg7[%c0_18, %c0_19], %22 {strides = array<i32>} : memref<2x128xf32, #tpu.memory_space<vmem>>, vector<2x128xf32>,
    return
  }
}

</mosaic_0001>

<llo_original>
// kernel: tpu_custom_call.1
$region0: #{tpu_custom_call.1}
  #allocation0 [shape = 'u32[]', space=smem, size = 0x4, offset = 0x4, fixed_abs, tag = 'smem constant byte address 0x4 - core index']
  #allocation1 [shape = 'u32[144,128]{1,0:T(1,128)}', space=vmem, size = 0x12000, scoped, tag = 'internal scratch']
  %s0 = inlined_call_operand.hbm [shape: f32[2,16], index: 0, kind: input, shape index: {}]
  %s1 = inlined_call_operand.hbm [shape: f32[16,256], index: 1, kind: input, shape index: {}]
  %s2 = inlined_call_operand.vmem [shape: f32[1,256], index: 2, kind: input, shape index: {}]
  %s3 = inlined_call_operand.hbm [shape: f32[256,256], index: 3, kind: input, shape index: {}]
  %s4 = inlined_call_operand.vmem [shape: f32[1,256], index: 4, kind: input, shape index: {}]
  %s5 = inlined_call_operand.hbm [shape: f32[256,128], index: 5, kind: input, shape index: {}]
  %s6 = inlined_call_operand.vmem [shape: f32[1,128], index: 6, kind: input, shape index: {}]
  %s7 = inlined_call_operand.hbm [shape: f32[2,128], index: 7, kind: output, shape index: {}]
  %s8 = sld [smem:[#allocation0]]
  $region54: #{tpu_custom_call.1} parent=0
    _
  %s10 = ssub.s32 1, %s8
  %s11 = scalar_select 0, %s10, %s8
  $region1: #{tpu_custom_call.1} parent=0
    #allocation2 [shape = 'u8[1024]{0}', space=vmem, size = 0x400, scoped, tag = 'input window, operand 0, single buffered']
    #allocation3 [shape = 's32[1]{0}', space=sflag, size = 0x4, scoped, tag = 'scoped memory for tpu_custom_call.1']
    #allocation4 [shape = 's32[1]{0}', space=sflag, size = 0x4, scoped, tag = 'scoped memory for tpu_custom_call.1']
    #allocation5 [shape = 'u8[16384]{0}', space=vmem, size = 0x4000, scoped, tag = 'input window, operand 1, single buffered']
    #allocation6 [shape = 's32[1]{0}', space=sflag, size = 0x4, scoped, tag = 'scoped memory for tpu_custom_call.1']
    #allocation7 [shape = 'u8[262144]{0}', space=vmem, size = 0x40000, scoped, tag = 'input window, operand 3, single buffered']
    #allocation8 [shape = 'u8[131072]{0}', space=vmem, size = 0x20000, scoped, tag = 'input window, operand 5, single buffered']
    #allocation9 [shape = 's32[1]{0}', space=sflag, size = 0x4, scoped, tag = 'scoped memory for tpu_custom_call.1']
    #allocation10 [shape = 'u8[1024]{0}', space=vmem, size = 0x400, scoped, tag = 'output window, operand 0, single buffered']
    %12 = vsyncpa [#allocation3], 0
    %13 = vsyncpa [#allocation6], 0
    %14 = vsyncpa [#allocation9], 0
    %15 = vsyncpa [#allocation4], 0
    // Predicated region
    $region2: #{tpu_custom_call.1} parent=1 // pred_check
      _
    $region3: #{tpu_custom_call.1} parent=1 // pred_check_branch
      %17 = sbr.rel (0) target = $region5
    $region4: #{tpu_custom_call.1} parent=1 // pred_region
      %s19 = ssub.s32 32, 32
      %20 = vsyncadd [#allocation3], %s19
      %s22 = sshll.u32 [#allocation2], 4
      %s23 = int_to_ptr.vmem [resolvable:$true] %s22
      %25 = dma.hbm_to_vmem [thread:$0]  %s0, 32, %s23, [#allocation3]
    $region5: #{tpu_custom_call.1} parent=1 // pred_fallthru
      _
    // Predicated region
    $region6: #{tpu_custom_call.1} parent=1 // pred_check
      _
    $region7: #{tpu_custom_call.1} parent=1 // pred_check_branch
      %27 = sbr.rel (0) target = $region9
    $region8: #{tpu_custom_call.1} parent=1 // pred_region
      %s29 = ssub.s32 512, 512
      %30 = vsyncadd [#allocation6], %s29
      %s31 = sshll.u32 [#allocation5], 4
      %s32 = int_to_ptr.vmem [resolvable:$true] %s31
      %37 = dma.hbm_to_vmem [thread:$0]  %s1, 512, %s32, [#allocation6], 256, 256, 16
    $region9: #{tpu_custom_call.1} parent=1 // pred_fallthru
      _
    // Predicated region
    $region10: #{tpu_custom_call.1} parent=1 // pred_check
      _
    $region11: #{tpu_custom_call.1} parent=1 // pred_check_branch
      %39 = sbr.rel (0) target = $region13
    $region12: #{tpu_custom_call.1} parent=1 // pred_region
      _
    $region13: #{tpu_custom_call.1} parent=1 // pred_fallthru
      _
    // Predicated region
    $region14: #{tpu_custom_call.1} parent=1 // pred_check
      _
    $region15: #{tpu_custom_call.1} parent=1 // pred_check_branch
      %41 = sbr.rel (0) target = $region17
    $region16: #{tpu_custom_call.1} parent=1 // pred_region
      %s43 = ssub.s32 8192, 8192
      %44 = vsyncadd [#allocation6], %s43
      %s45 = sshll.u32 [#allocation7], 4
      %s46 = int_to_ptr.vmem [resolvable:$true] %s45
      %51 = dma.hbm_to_vmem [thread:$0]  %s3, 8192, %s46, [#allocation6], 256, 256, 16
    $region17: #{tpu_custom_call.1} parent=1 // pred_fallthru
      _
    // Predicated region
    $region18: #{tpu_custom_call.1} parent=1 // pred_check
      _
    $region19: #{tpu_custom_call.1} parent=1 // pred_check_branch
      %53 = sbr.rel (0) target = $region21
    $region20: #{tpu_custom_call.1} parent=1 // pred_region
      _
    $region21: #{tpu_custom_call.1} parent=1 // pred_fallthru
      _
    // Predicated region
    $region22: #{tpu_custom_call.1} parent=1 // pred_check
      _
    $region23: #{tpu_custom_call.1} parent=1 // pred_check_branch
      %55 = sbr.rel (0) target = $region25
    $region24: #{tpu_custom_call.1} parent=1 // pred_region
      %s57 = ssub.s32 4096, 4096
      %58 = vsyncadd [#allocation9], %s57
      %s59 = sshll.u32 [#allocation8], 4
      %s60 = int_to_ptr.vmem [resolvable:$true] %s59
      %65 = dma.hbm_to_vmem [thread:$0]  %s5, 4096, %s60, [#allocation9], 128, 128, 8
    $region25: #{tpu_custom_call.1} parent=1 // pred_fallthru
      _
    // Predicated region
    $region26: #{tpu_custom_call.1} parent=1 // pred_check
      _
    $region27: #{tpu_custom_call.1} parent=1 // pred_check_branch
      %67 = sbr.rel (0) target = $region29
    $region28: #{tpu_custom_call.1} parent=1 // pred_region
      _
    $region29: #{tpu_custom_call.1} parent=1 // pred_fallthru
      _
    // Predicated region
    $region30: #{tpu_custom_call.1} parent=1 // pred_check
      _
    $region31: #{tpu_custom_call.1} parent=1 // pred_check_branch
      %69 = sbr.rel (0) target = $region33
    $region32: #{tpu_custom_call.1} parent=1 // pred_region
      %70 = dma.done [#allocation3], 32
    $region33: #{tpu_custom_call.1} parent=1 // pred_fallthru
      _
    // Predicated region
    $region34: #{tpu_custom_call.1} parent=1 // pred_check
      _
    $region35: #{tpu_custom_call.1} parent=1 // pred_check_branch
      %72 = sbr.rel (0) target = $region37
    $region36: #{tpu_custom_call.1} parent=1 // pred_region
      %73 = dma.done [#allocation6], 512
    $region37: #{tpu_custom_call.1} parent=1 // pred_fallthru
      _
    // Predicated region
    $region38: #{tpu_custom_call.1} parent=1 // pred_check
      _
    $region39: #{tpu_custom_call.1} parent=1 // pred_check_branch
      %75 = sbr.rel (0) target = $region41
    $region40: #{tpu_custom_call.1} parent=1 // pred_region
      %76 = dma.done [#allocation6], 8192
    $region41: #{tpu_custom_call.1} parent=1 // pred_fallthru
      _
    // Predicated region
    $region42: #{tpu_custom_call.1} parent=1 // pred_check
      _
    $region43: #{tpu_custom_call.1} parent=1 // pred_check_branch
      %78 = sbr.rel (0) target = $region45
    $region44: #{tpu_custom_call.1} parent=1 // pred_region
      %79 = dma.done [#allocation9], 4096
    $region45: #{tpu_custom_call.1} parent=1 // pred_fallthru
      _
    %v80 = vld [vmem:[#allocation2] sm:$0x3]
    %v81 = vld [vmem:[#allocation5] sm:$0xff]
    %v82 = vld [vmem:[#allocation5 + $0x8] sm:$0xff]
    %v83 = vld [vmem:[#allocation5 + $0x10] sm:$0xff]
    %v84 = vld [vmem:[#allocation5 + $0x18] sm:$0xff]
    %v85 = vld [vmem:[%s2] sm:$0x3]
    %v87 = vlaneseq
    %v88 = vshrl.u32 %v87, 7
    %v89 = vsub.s32 0, %v88
    %v90 = vrot.slane %v85, %v89
    %v91 = vlaneseq
    %v92 = vshrl.u32 %v91, 7
    %v93 = vsub.s32 1, %v92
    %v94 = vrot.slane %v85, %v93
    %vm97 = vcmask 130048
    %v99 = vsel %vm97, %v80, 0
    %101 = vmatprep.subr.mxu0 %v82
    %102 = vmatpush1.msra.mxu0 %v81
    %103 = vmatprep.subr.mxu0 %v84
    %104 = vmatpush1.msra.mxu0 %v83
    %105 = vmatprep.subr.mxu0 0.0
    %106 = vmatpush1.msra.mxu0 0.0
    %107 = vmatprep.subr.mxu0 0.0
    %108 = vmatpush1.msra.mxu0 0.0
    %109 = vmatprep.subr.mxu0 0.0
    %110 = vmatpush1.msra.mxu0 0.0
    %111 = vmatprep.subr.mxu0 0.0
    %112 = vmatpush1.msra.mxu0 0.0
    %113 = vmatprep.subr.mxu0 0.0
    %114 = vmatpush1.msra.mxu0 0.0
    %115 = vmatprep.subr.mxu0 0.0
    %116 = vmatpush1.msra.mxu0 0.0
    %117 = vmatprep.subr.mxu0 0.0
    %118 = vmatpush1.msra.mxu0 0.0
    %119 = vmatprep.subr.mxu0 0.0
    %120 = vmatpush1.msra.mxu0 0.0
    %121 = vmatprep.subr.mxu0 0.0
    %122 = vmatpush1.msra.mxu0 0.0
    %123 = vmatprep.subr.mxu0 0.0
    %124 = vmatpush1.msra.mxu0 0.0
    %125 = vmatprep.subr.mxu0 0.0
    %126 = vmatpush1.msra.mxu0 0.0
    %127 = vmatprep.subr.mxu0 0.0
    %128 = vmatpush1.msra.mxu0 0.0
    %129 = vmatprep.subr.mxu0 0.0
    %130 = vmatpush1.msra.mxu0 0.0
    %131 = vmatprep.subr.mxu0 0.0
    %132 = vmatpush1.msra.mxu0 0.0
    %133 = vmatprep.subr.mxu0 0.0
    %134 = vmatpush1.msra.mxu0 0.0
    %135 = vmatprep.subr.mxu0 0.0
    %136 = vmatpush1.msra.mxu0 0.0
    %137 = vmatprep.subr.mxu0 0.0
    %138 = vmatpush1.msra.mxu0 0.0
    %139 = vmatprep.subr.mxu0 0.0
    %140 = vmatpush1.msra.mxu0 0.0
    %141 = vmatprep.subr.mxu0 0.0
    %142 = vmatpush1.msra.mxu0 0.0
    %143 = vmatprep.subr.mxu0 0.0
    %144 = vmatpush1.msra.mxu0 0.0
    %145 = vmatprep.subr.mxu0 0.0
    %146 = vmatpush1.msra.mxu0 0.0
    %147 = vmatprep.subr.mxu0 0.0
    %148 = vmatpush1.msra.mxu0 0.0
    %149 = vmatprep.subr.mxu0 0.0
    %150 = vmatpush1.msra.mxu0 0.0
    %151 = vmatprep.subr.mxu0 0.0
    %152 = vmatpush1.msra.mxu0 0.0
    %153 = vmatprep.subr.mxu0 0.0
    %154 = vmatpush1.msra.mxu0 0.0
    %155 = vmatprep.subr.mxu0 0.0
    %156 = vmatpush1.msra.mxu0 0.0
    %157 = vmatprep.subr.mxu0 0.0
    %158 = vmatpush1.msra.mxu0 0.0
    %159 = vmatprep.subr.mxu0 0.0
    %160 = vmatpush1.msra.mxu0 0.0
    %161 = vmatprep.subr.mxu0 0.0
    %162 = vmatpush1.msra.mxu0 0.0
    %163 = vmatprep.subr.mxu0 0.0
    %164 = vmatpush1.msra.mxu0 0.0
    %165 = vmatprep.mubr.f32.mxu0 0.0
    %166 = vmatmul.mubr.f32.gmra.mrb[0].mxu0 %v99
    %v167 = vpop.f32.mrb[0].mxu0
    %v168 = vadd.f32 %v90, %v167
    %v169 = vpop.f32.mrb[0].mxu0
    %v170 = vadd.f32 %v94, %v169
    %171 = vdwg.mxu0
    %v172 = vmax.f32 %v168, 0.0
    %v173 = vmax.f32 %v170, 0.0
    %v174 = vld [vmem:[#allocation7] sm:$0xff]
    %v175 = vld [vmem:[#allocation7 + $0x8] sm:$0xff]
    %v176 = vld [vmem:[#allocation7 + $0x10] sm:$0xff]
    %v177 = vld [vmem:[#allocation7 + $0x18] sm:$0xff]
    %v178 = vld [vmem:[#allocation7 + $0x20] sm:$0xff]
    %v179 = vld [vmem:[#allocation7 + $0x28] sm:$0xff]
    %v180 = vld [vmem:[#allocation7 + $0x30] sm:$0xff]
    %v181 = vld [vmem:[#allocation7 + $0x38] sm:$0xff]
    %v182 = vld [vmem:[#allocation7 + $0x40] sm:$0xff]
    %v183 = vld [vmem:[#allocation7 + $0x48] sm:$0xff]
    %v184 = vld [vmem:[#allocation7 + $0x50] sm:$0xff]
    %v185 = vld [vmem:[#allocation7 + $0x58] sm:$0xff]
    %v186 = vld [vmem:[#allocation7 + $0x60] sm:$0xff]
    %v187 = vld [vmem:[#allocation7 + $0x68] sm:$0xff]
    %v188 = vld [vmem:[#allocation7 + $0x70] sm:$0xff]
    %v189 = vld [vmem:[#allocation7 + $0x78] sm:$0xff]
    %v190 = vld [vmem:[#allocation7 + $0x80] sm:$0xff]
    %v191 = vld [vmem:[#allocation7 + $0x88] sm:$0xff]
    %v192 = vld [vmem:[#allocation7 + $0x90] sm:$0xff]
    %v193 = vld [vmem:[#allocation7 + $0x98] sm:$0xff]
    %v194 = vld [vmem:[#allocation7 + $0xa0] sm:$0xff]
    %v195 = vld [vmem:[#allocation7 + $0xa8] sm:$0xff]
    %v196 = vld [vmem:[#allocation7 + $0xb0] sm:$0xff]
    %v197 = vld [vmem:[#allocation7 + $0xb8] sm:$0xff]
    %v198 = vld [vmem:[#allocation7 + $0xc0] sm:$0xff]
    %v199 = vld [vmem:[#allocation7 + $0xc8] sm:$0xff]
    %v200 = vld [vmem:[#allocation7 + $0xd0] sm:$0xff]
    %v201 = vld [vmem:[#allocation7 + $0xd8] sm:$0xff]
    %v202 = vld [vmem:[#allocation7 + $0xe0] sm:$0xff]
    %v203 = vld [vmem:[#allocation7 + $0xe8] sm:$0xff]
    %v204 = vld [vmem:[#allocation7 + $0xf0] sm:$0xff]
    %v205 = vld [vmem:[#allocation7 + $0xf8] sm:$0xff]
    %v206 = vld [vmem:[#allocation7 + $0x100] sm:$0xff]
    %v207 = vld [vmem:[#allocation7 + $0x108] sm:$0xff]
    %v208 = vld [vmem:[#allocation7 + $0x110] sm:$0xff]
    %v209 = vld [vmem:[#allocation7 + $0x118] sm:$0xff]
    %v210 = vld [vmem:[#allocation7 + $0x120] sm:$0xff]
    %v211 = vld [vmem:[#allocation7 + $0x128] sm:$0xff]
    %v212 = vld [vmem:[#allocation7 + $0x130] sm:$0xff]
    %v213 = vld [vmem:[#allocation7 + $0x138] sm:$0xff]
    %v214 = vld [vmem:[#allocation7 + $0x140] sm:$0xff]
    %v215 = vld [vmem:[#allocation7 + $0x148] sm:$0xff]
    %v216 = vld [vmem:[#allocation7 + $0x150] sm:$0xff]
    %v217 = vld [vmem:[#allocation7 + $0x158] sm:$0xff]
    %v218 = vld [vmem:[#allocation7 + $0x160] sm:$0xff]
    %v219 = vld [vmem:[#allocation7 + $0x168] sm:$0xff]
    %v220 = vld [vmem:[#allocation7 + $0x170] sm:$0xff]
    %v221 = vld [vmem:[#allocation7 + $0x178] sm:$0xff]
    %v222 = vld [vmem:[#allocation7 + $0x180] sm:$0xff]
    %v223 = vld [vmem:[#allocation7 + $0x188] sm:$0xff]
    %v224 = vld [vmem:[#allocation7 + $0x190] sm:$0xff]
    %v225 = vld [vmem:[#allocation7 + $0x198] sm:$0xff]
    %v226 = vld [vmem:[#allocation7 + $0x1a0] sm:$0xff]
    %v227 = vld [vmem:[#allocation7 + $0x1a8] sm:$0xff]
    %v228 = vld [vmem:[#allocation7 + $0x1b0] sm:$0xff]
    %v229 = vld [vmem:[#allocation7 + $0x1b8] sm:$0xff]
    %v230 = vld [vmem:[#allocation7 + $0x1c0] sm:$0xff]
    %v231 = vld [vmem:[#allocation7 + $0x1c8] sm:$0xff]
    %v232 = vld [vmem:[#allocation7 + $0x1d0] sm:$0xff]
    %v233 = vld [vmem:[#allocation7 + $0x1d8] sm:$0xff]
    %v234 = vld [vmem:[#allocation7 + $0x1e0] sm:$0xff]
    %v235 = vld [vmem:[#allocation7 + $0x1e8] sm:$0xff]
    %v236 = vld [vmem:[#allocation7 + $0x1f0] sm:$0xff]
    %v237 = vld [vmem:[#allocation7 + $0x1f8] sm:$0xff]
    %v238 = vld [vmem:[%s4] sm:$0x3]
    %v240 = vlaneseq
    %v241 = vshrl.u32 %v240, 7
    %v242 = vsub.s32 0, %v241
    %v243 = vrot.slane %v238, %v242
    %v244 = vlaneseq
    %v245 = vshrl.u32 %v244, 7
    %v246 = vsub.s32 1, %v245
    %v247 = vrot.slane %v238, %v246
    %250 = vmatprep.subr.mxu0 %v175
    %251 = vmatpush1.msra.mxu0 %v174
    %252 = vmatprep.subr.mxu0 %v177
    %253 = vmatpush1.msra.mxu0 %v176
    %254 = vmatprep.subr.mxu0 %v179
    %255 = vmatpush1.msra.mxu0 %v178
    %256 = vmatprep.subr.mxu0 %v181
    %257 = vmatpush1.msra.mxu0 %v180
    %258 = vmatprep.subr.mxu0 %v183
    %259 = vmatpush1.msra.mxu0 %v182
    %260 = vmatprep.subr.mxu0 %v185
    %261 = vmatpush1.msra.mxu0 %v184
    %262 = vmatprep.subr.mxu0 %v187
    %263 = vmatpush1.msra.mxu0 %v186
    %264 = vmatprep.subr.mxu0 %v189
    %265 = vmatpush1.msra.mxu0 %v188
    %266 = vmatprep.subr.mxu0 %v191
    %267 = vmatpush1.msra.mxu0 %v190
    %268 = vmatprep.subr.mxu0 %v193
    %269 = vmatpush1.msra.mxu0 %v192
    %270 = vmatprep.subr.mxu0 %v195
    %271 = vmatpush1.msra.mxu0 %v194
    %272 = vmatprep.subr.mxu0 %v197
    %273 = vmatpush1.msra.mxu0 %v196
    %274 = vmatprep.subr.mxu0 %v199
    %275 = vmatpush1.msra.mxu0 %v198
    %276 = vmatprep.subr.mxu0 %v201
    %277 = vmatpush1.msra.mxu0 %v200
    %278 = vmatprep.subr.mxu0 %v203
    %279 = vmatpush1.msra.mxu0 %v202
    %280 = vmatprep.subr.mxu0 %v205
    %281 = vmatpush1.msra.mxu0 %v204
    %282 = vmatprep.subr.mxu0 %v207
    %283 = vmatpush1.msra.mxu0 %v206
    %284 = vmatprep.subr.mxu0 %v209
    %285 = vmatpush1.msra.mxu0 %v208
    %286 = vmatprep.subr.mxu0 %v211
    %287 = vmatpush1.msra.mxu0 %v210
    %288 = vmatprep.subr.mxu0 %v213
    %289 = vmatpush1.msra.mxu0 %v212
    %290 = vmatprep.subr.mxu0 %v215
    %291 = vmatpush1.msra.mxu0 %v214
    %292 = vmatprep.subr.mxu0 %v217
    %293 = vmatpush1.msra.mxu0 %v216
    %294 = vmatprep.subr.mxu0 %v219
    %295 = vmatpush1.msra.mxu0 %v218
    %296 = vmatprep.subr.mxu0 %v221
    %297 = vmatpush1.msra.mxu0 %v220
    %298 = vmatprep.subr.mxu0 %v223
    %299 = vmatpush1.msra.mxu0 %v222
    %300 = vmatprep.subr.mxu0 %v225
    %301 = vmatpush1.msra.mxu0 %v224
    %302 = vmatprep.subr.mxu0 %v227
    %303 = vmatpush1.msra.mxu0 %v226
    %304 = vmatprep.subr.mxu0 %v229
    %305 = vmatpush1.msra.mxu0 %v228
    %306 = vmatprep.subr.mxu0 %v231
    %307 = vmatpush1.msra.mxu0 %v230
    %308 = vmatprep.subr.mxu0 %v233
    %309 = vmatpush1.msra.mxu0 %v232
    %310 = vmatprep.subr.mxu0 %v235
    %311 = vmatpush1.msra.mxu0 %v234
    %312 = vmatprep.subr.mxu0 %v237
    %313 = vmatpush1.msra.mxu0 %v236
    %314 = vmatprep.mubr.f32.mxu0 %v173
    %315 = vmatmul.mubr.f32.gmra.mrb[0].mxu0 %v172
    %v316 = vpop.f32.mrb[0].mxu0
    %v317 = vadd.f32 %v243, %v316
    %v318 = vpop.f32.mrb[0].mxu0
    %v319 = vadd.f32 %v247, %v318
    %320 = vdwg.mxu0
    %v321 = vmax.f32 %v317, 0.0
    %v322 = vmax.f32 %v319, 0.0
    %v323 = vld [vmem:[#allocation8] sm:$0xff]
    %v324 = vld [vmem:[#allocation8 + $0x8] sm:$0xff]
    %v325 = vld [vmem:[#allocation8 + $0x10] sm:$0xff]
    %v326 = vld [vmem:[#allocation8 + $0x18] sm:$0xff]
    %v327 = vld [vmem:[#allocation8 + $0x20] sm:$0xff]
    %v328 = vld [vmem:[#allocation8 + $0x28] sm:$0xff]
    %v329 = vld [vmem:[#allocation8 + $0x30] sm:$0xff]
    %v330 = vld [vmem:[#allocation8 + $0x38] sm:$0xff]
    %v331 = vld [vmem:[#allocation8 + $0x40] sm:$0xff]
    %v332 = vld [vmem:[#allocation8 + $0x48] sm:$0xff]
    %v333 = vld [vmem:[#allocation8 + $0x50] sm:$0xff]
    %v334 = vld [vmem:[#allocation8 + $0x58] sm:$0xff]
    %v335 = vld [vmem:[#allocation8 + $0x60] sm:$0xff]
    %v336 = vld [vmem:[#allocation8 + $0x68] sm:$0xff]
    %v337 = vld [vmem:[#allocation8 + $0x70] sm:$0xff]
    %v338 = vld [vmem:[#allocation8 + $0x78] sm:$0xff]
    %v339 = vld [vmem:[#allocation8 + $0x80] sm:$0xff]
    %v340 = vld [vmem:[#allocation8 + $0x88] sm:$0xff]
    %v341 = vld [vmem:[#allocation8 + $0x90] sm:$0xff]
    %v342 = vld [vmem:[#allocation8 + $0x98] sm:$0xff]
    %v343 = vld [vmem:[#allocation8 + $0xa0] sm:$0xff]
    %v344 = vld [vmem:[#allocation8 + $0xa8] sm:$0xff]
    %v345 = vld [vmem:[#allocation8 + $0xb0] sm:$0xff]
    %v346 = vld [vmem:[#allocation8 + $0xb8] sm:$0xff]
    %v347 = vld [vmem:[#allocation8 + $0xc0] sm:$0xff]
    %v348 = vld [vmem:[#allocation8 + $0xc8] sm:$0xff]
    %v349 = vld [vmem:[#allocation8 + $0xd0] sm:$0xff]
    %v350 = vld [vmem:[#allocation8 + $0xd8] sm:$0xff]
    %v351 = vld [vmem:[#allocation8 + $0xe0] sm:$0xff]
    %v352 = vld [vmem:[#allocation8 + $0xe8] sm:$0xff]
    %v353 = vld [vmem:[#allocation8 + $0xf0] sm:$0xff]
    %v354 = vld [vmem:[#allocation8 + $0xf8] sm:$0xff]
    %v355 = vld [vmem:[%s6] sm:$0x1]
    %v357 = vlaneseq
    %v358 = vshrl.u32 %v357, 7
    %v359 = vsub.s32 0, %v358
    %v360 = vrot.slane %v355, %v359
    %362 = vmatprep.subr.mxu0 0.0
    %363 = vmatpush1.msra.mxu0 %v323
    %364 = vmatprep.subr.mxu0 0.0
    %365 = vmatpush1.msra.mxu0 %v324
    %366 = vmatprep.subr.mxu0 0.0
    %367 = vmatpush1.msra.mxu0 %v325
    %368 = vmatprep.subr.mxu0 0.0
    %369 = vmatpush1.msra.mxu0 %v326
    %370 = vmatprep.subr.mxu0 0.0
    %371 = vmatpush1.msra.mxu0 %v327
    %372 = vmatprep.subr.mxu0 0.0
    %373 = vmatpush1.msra.mxu0 %v328
    %374 = vmatprep.subr.mxu0 0.0
    %375 = vmatpush1.msra.mxu0 %v329
    %376 = vmatprep.subr.mxu0 0.0
    %377 = vmatpush1.msra.mxu0 %v330
    %378 = vmatprep.subr.mxu0 0.0
    %379 = vmatpush1.msra.mxu0 %v331
    %380 = vmatprep.subr.mxu0 0.0
    %381 = vmatpush1.msra.mxu0 %v332
    %382 = vmatprep.subr.mxu0 0.0
    %383 = vmatpush1.msra.mxu0 %v333
    %384 = vmatprep.subr.mxu0 0.0
    %385 = vmatpush1.msra.mxu0 %v334
    %386 = vmatprep.subr.mxu0 0.0
    %387 = vmatpush1.msra.mxu0 %v335
    %388 = vmatprep.subr.mxu0 0.0
    %389 = vmatpush1.msra.mxu0 %v336
    %390 = vmatprep.subr.mxu0 0.0
    %391 = vmatpush1.msra.mxu0 %v337
    %392 = vmatprep.subr.mxu0 0.0
    %393 = vmatpush1.msra.mxu0 %v338
    %394 = vmatprep.subr.mxu0 0.0
    %395 = vmatpush1.msra.mxu0 %v339
    %396 = vmatprep.subr.mxu0 0.0
    %397 = vmatpush1.msra.mxu0 %v340
    %398 = vmatprep.subr.mxu0 0.0
    %399 = vmatpush1.msra.mxu0 %v341
    %400 = vmatprep.subr.mxu0 0.0
    %401 = vmatpush1.msra.mxu0 %v342
    %402 = vmatprep.subr.mxu0 0.0
    %403 = vmatpush1.msra.mxu0 %v343
    %404 = vmatprep.subr.mxu0 0.0
    %405 = vmatpush1.msra.mxu0 %v344
    %406 = vmatprep.subr.mxu0 0.0
    %407 = vmatpush1.msra.mxu0 %v345
    %408 = vmatprep.subr.mxu0 0.0
    %409 = vmatpush1.msra.mxu0 %v346
    %410 = vmatprep.subr.mxu0 0.0
    %411 = vmatpush1.msra.mxu0 %v347
    %412 = vmatprep.subr.mxu0 0.0
    %413 = vmatpush1.msra.mxu0 %v348
    %414 = vmatprep.subr.mxu0 0.0
    %415 = vmatpush1.msra.mxu0 %v349
    %416 = vmatprep.subr.mxu0 0.0
    %417 = vmatpush1.msra.mxu0 %v350
    %418 = vmatprep.subr.mxu0 0.0
    %419 = vmatpush1.msra.mxu0 %v351
    %420 = vmatprep.subr.mxu0 0.0
    %421 = vmatpush1.msra.mxu0 %v352
    %422 = vmatprep.subr.mxu0 0.0
    %423 = vmatpush1.msra.mxu0 %v353
    %424 = vmatprep.subr.mxu0 0.0
    %425 = vmatpush1.msra.mxu0 %v354
    %426 = vmatprep.mubr.f32.mxu0 %v322
    %427 = vmatmul.mubr.f32.gmra.mrb[0].mxu0 %v321
    %v428 = vpop.f32.mrb[0].mxu0
    %v429 = vadd.f32 %v360, %v428
    %v430 = vpop.f32.mrb[0].mxu0
    %431 = vdwg.mxu0
    %v432 = vtanh.pop %v429
    %v433 = vmul.f32 %v432, 2.0
    %434 = vst [vmem:[#allocation10] sm:$0x3] %v433
    // Predicated region
    $region46: #{tpu_custom_call.1} parent=1 // pred_check
      _
    $region47: #{tpu_custom_call.1} parent=1 // pred_check_branch
      %436 = sbr.rel (0) target = $region49
    $region48: #{tpu_custom_call.1} parent=1 // pred_region
      %s438 = ssub.s32 32, 32
      %439 = vsyncadd [#allocation4], %s438
      %s441 = sshll.u32 [#allocation10], 4
      %s442 = int_to_ptr.vmem [resolvable:$true] %s441
      %444 = dma.vmem_to_hbm [thread:$0]  %s442, 32, %s7, [#allocation4]
    $region49: #{tpu_custom_call.1} parent=1 // pred_fallthru
      _
    // Predicated region
    $region50: #{tpu_custom_call.1} parent=1 // pred_check
      _
    $region51: #{tpu_custom_call.1} parent=1 // pred_check_branch
      %446 = sbr.rel (0) target = $region53
    $region52: #{tpu_custom_call.1} parent=1 // pred_region
      %447 = dma.done [#allocation4], 32
    $region53: #{tpu_custom_call.1} parent=1 // pred_fallthru
      _
    %448 = vsyncpa [#allocation3], 1
    %449 = vsyncpa [#allocation6], 1
    %450 = vsyncpa [#allocation9], 1
    %451 = vsyncpa [#allocation4], 1

</llo_original>
